<compile_context>
chip_gen: v7x
topology: tpu7x:2x2x1
jax: 0.10.0
libtpu: 0.0.40
codegen_flags: <defaults>
</compile_context>

<pallas_src>
import functools

import jax
import jax.numpy as jnp
import numpy as np
from jax import lax
from jax.experimental import pallas as pl
from jax.experimental.pallas import tpu as pltpu


def _round_up(x, m):
    return (x + m - 1) // m * m


def _sepconv_kernel(x_ref, prev_ref, next_ref, wdw_ref, wpw_ref, o_ref, *,
                    ksize, pad, n_in, n_out, row_chunk, use_vpu_pw, mxu_dtype):
    """One (batch, L-tile) block per grid step.

    x_ref   : (1, n_in, C_in)     input rows of this tile (no halo)
    prev_ref: (1, 1, HP, C_in)    the `pad` rows just before the tile (zeros
                                  at the global left boundary)
    next_ref: (1, 1, HN, C_in)    the rows just after the tile (zeros at the
                                  global right boundary)
    wdw_ref : (K, C_in)           depthwise weights
    wpw_ref : (C_in, CP_out)      pointwise weights, output lane-padded to 128
    o_ref   : (1, n_out, CP_out)
    """
    f32 = jnp.float32
    c_in = x_ref.shape[-1]

    # Hoist weight loads out of all loops (JAX does not CSE re-broadcasts).
    wdw_rows = [wdw_ref[j:j + 1, :].astype(f32) for j in range(ksize)]
    wpw = wpw_ref[...].astype(f32)
    wpw_mm = wpw.astype(mxu_dtype)

    def load_rows(s0, s1):
        # Tile-local input rows [s0, s1) as an (s1 - s0, C_in) value.  Rows
        # < 0 come from the prev halo, rows >= n_in from the next halo.  All
        # index arithmetic is static Python; interior chunks are a single
        # direct ref slice (no copies, no full-tile materialization).
        pieces = []
        p_lo, p_hi = s0, min(s1, 0)
        if p_lo < p_hi:
            pieces.append(prev_ref[0, 0, p_lo + pad:p_hi + pad, :])
        m_lo, m_hi = max(s0, 0), min(s1, n_in)
        if m_lo < m_hi:
            pieces.append(x_ref[0, m_lo:m_hi, :])
        q_lo, q_hi = max(s0, n_in), s1
        if q_lo < q_hi:
            pieces.append(next_ref[0, 0, q_lo - n_in:q_hi - n_in, :])
        w = pieces[0] if len(pieces) == 1 else jnp.concatenate(pieces, axis=0)
        return w.astype(f32)

    # Process the tile in row chunks so live vreg footprint stays bounded
    # while the DMA block (the whole tile) stays large.
    for a in range(0, n_out, row_chunk):
        nr = min(row_chunk, n_out - a)
        acc = jnp.zeros((nr, c_in), f32)
        for j in range(ksize):        # depthwise conv: K shifted slices (VPU)
            acc = acc + load_rows(a + j - pad, a + j - pad + nr) * wdw_rows[j]
        y = jnp.maximum(acc, 0.0)     # ReLU
        if use_vpu_pw:
            # Tiny C_in: do the 1x1 conv as VPU multiply-adds (MXU would be
            # >97% idle and we'd only pay its drain latency).
            out = y[:, 0:1] * wpw[0:1, :]
            for ci in range(1, c_in):
                out = out + y[:, ci:ci + 1] * wpw[ci:ci + 1, :]
        else:
            out = jnp.dot(y.astype(mxu_dtype), wpw_mm,
                          preferred_element_type=f32)
        o_ref[0, a:a + nr, :] = out.astype(o_ref.dtype)


def child_sep_conv(x, w_depthwise, w_pointwise, kernel_size, *,
                   use_bf16_matmul=False, max_rows_per_tile=512):
    """Forward pass of ChildSepConv.

    x           : (B, L, C_in) float32
    w_depthwise : (C_in, 1, K)      PyTorch depthwise Conv1d weight layout
    w_pointwise : (C_out, C_in, 1)  PyTorch pointwise Conv1d weight layout
    Returns (B, L_out, C_out_eff) matching the PyTorch module
    (L_out = L, or L+1 for even K; C_out_eff = C_out, or C_out-1 for even K).

    use_bf16_matmul: feed bf16 operands to the MXU for the 1x1 conv
    (recommended on v6e/v7x when the accuracy budget allows; f32 accumulate).
    max_rows_per_tile: upper bound on the L tile (mainly for testing).
    """
    B, L, C_in = x.shape
    K = int(kernel_size)
    pad = K // 2
    L_out = L + 2 * pad - K + 1                 # == L (odd K) or L + 1 (even K)
    C_out = int(w_pointwise.shape[0])
    C_out_eff = C_out - 1 if K % 2 == 0 else C_out   # even K drops last channel

    # ---- weights: layout reshuffle, dead-channel drop, lane padding --------
    wdw = jnp.transpose(w_depthwise[:, 0, :], (1, 0)).astype(jnp.float32)       # (K, C_in)
    wpw = jnp.transpose(w_pointwise[:C_out_eff, :, 0], (1, 0)).astype(jnp.float32)  # (C_in, C_out_eff)
    CP_out = _round_up(C_out_eff, 128)
    if CP_out != C_out_eff:
        wpw = jnp.pad(wpw, ((0, 0), (0, CP_out - C_out_eff)))

    # ---- L tile: largest tile (<=512 rows) whose double-buffered in+out
    # blocks fit a ~24 MiB budget (safe on v7x's 64 MiB VMEM). ---------------
    bytes_per_row = 2 * 4 * (C_in + CP_out)
    tl_cap = min(512, max(8, (24 * 1024 * 1024 // bytes_per_row) // 8 * 8))
    tl_cap = min(tl_cap, max(8, int(max_rows_per_tile) // 8 * 8))

    if L_out <= tl_cap:
        # Single tile per batch element: full-length blocks, no padding.
        num_t, n_out, n_in = 1, L_out, L
        x_in = x
    else:
        tl = None
        if L_out == L:                           # odd K: try an exact divisor
            for cand in range(tl_cap, 63, -8):
                if L % cand == 0:
                    tl = cand
                    break
        if tl is None:
            tl = tl_cap
        num_t = pl.cdiv(L_out, tl)
        n_out = n_in = tl
        lp = num_t * tl
        # Only when the tile cannot divide L do we zero-pad the small tail
        # (never a full "same" pad of the whole array).
        x_in = x if lp == L else jnp.pad(x, ((0, 0), (0, lp - L), (0, 0)))

    L_src = x_in.shape[1]

    # ---- tiny halo tensors: the few rows around each tile boundary ---------
    HP = max(pad, 1)
    HN = max(n_out - n_in + K - 1 - pad, 1)
    t_idx = jnp.arange(num_t, dtype=jnp.int32)

    def gather_rows(row_idx):                    # row_idx: (num_t, H) int32
        valid = (row_idx >= 0) & (row_idx < L_src)
        safe = jnp.clip(row_idx, 0, L_src - 1)
        g = jnp.take(x_in, safe.reshape(-1), axis=1)
        g = g.reshape(B, num_t, row_idx.shape[1], C_in)
        return jnp.where(valid[None, :, :, None], g, 0).astype(x.dtype)

    prev_halo = gather_rows(t_idx[:, None] * n_in - pad + jnp.arange(HP)[None, :])
    next_halo = gather_rows(t_idx[:, None] * n_in + n_in + jnp.arange(HN)[None, :])

    # ---- kernel launch ------------------------------------------------------
    use_vpu_pw = C_in <= 16
    mxu_dtype = jnp.bfloat16 if (use_bf16_matmul and not use_vpu_pw) else jnp.float32
    # Row chunk inside the kernel: bounds the live (acc + out) vreg footprint.
    row_chunk = min(128, max(8, (128 * 1024 // (4 * (C_in + CP_out))) // 8 * 8))
    row_chunk = min(row_chunk, n_out)

    kernel = functools.partial(
        _sepconv_kernel, ksize=K, pad=pad, n_in=n_in, n_out=n_out,
        row_chunk=row_chunk, use_vpu_pw=use_vpu_pw, mxu_dtype=mxu_dtype)

    out = pl.pallas_call(
        kernel,
        out_shape=jax.ShapeDtypeStruct((B, num_t * n_out, CP_out), x.dtype),
        grid_spec=pltpu.PrefetchScalarGridSpec(
            num_scalar_prefetch=0,
            grid=(B, num_t),
            in_specs=[
                pl.BlockSpec((1, n_in, C_in), lambda b, t: (b, t, 0)),
                pl.BlockSpec((1, 1, HP, C_in), lambda b, t: (b, t, 0, 0)),
                pl.BlockSpec((1, 1, HN, C_in), lambda b, t: (b, t, 0, 0)),
                pl.BlockSpec((K, C_in), lambda b, t: (0, 0)),
                pl.BlockSpec((C_in, CP_out), lambda b, t: (0, 0)),
            ],
            out_specs=pl.BlockSpec((1, n_out, CP_out), lambda b, t: (b, t, 0)),
        ),
        compiler_params=pltpu.CompilerParams(
            dimension_semantics=("parallel", "parallel"),
            vmem_limit_bytes=32 * 1024 * 1024),
    )(x_in, prev_halo, next_halo, wdw, wpw)

    # Strip the lane padding (and any over-tiled rows).
    return out[:, :L_out, :C_out_eff]


def _reference(x, w_depthwise, w_pointwise, kernel_size):
    """Pure-JAX reference mirroring the PyTorch forward exactly."""
    K = int(kernel_size)
    pad = K // 2
    x_ncl = jnp.transpose(x, (0, 2, 1))          # (B, C_in, L)
    C_in = x_ncl.shape[1]
    y = lax.conv_general_dilated(
        x_ncl, w_depthwise, window_strides=(1,), padding=[(pad, pad)],
        feature_group_count=C_in, dimension_numbers=("NCH", "OIH", "NCH"),
        precision=lax.Precision.HIGHEST)
    y = jnp.maximum(y, 0.0)
    z = lax.conv_general_dilated(
        y, w_pointwise, window_strides=(1,), padding=[(0, 0)],
        dimension_numbers=("NCH", "OIH", "NCH"),
        precision=lax.Precision.HIGHEST)
    z = jnp.transpose(z, (0, 2, 1))              # (B, L_out, C_out)
    if K % 2 == 0:
        z = z[:, :, :-1]
    return z


if __name__ == "__main__":
    key = jax.random.PRNGKey(0)

    configs = [
        # (B, L, C_in, C_out, K, max_rows_per_tile, tol)
        (2, 8, 4, 8, 3, 512, 1e-5),    # original toy shape; VPU pointwise path
        (2, 16, 4, 6, 4, 512, 1e-5),   # even K: extra time step + channel drop
        (2, 32, 32, 8, 5, 8, 1e-4),    # forced tiny tile -> multi-tile halo path + MXU
    ]

    for (B, L, C_in, C_out, K, max_rows, tol) in configs:
        k_x, k_dw, k_pw, key = jax.random.split(key, 4)
        x = jax.random.normal(k_x, (B, L, C_in), dtype=jnp.float32)
        # PyTorch Conv1d weight shapes.
        w_dw = jax.random.normal(k_dw, (C_in, 1, K), dtype=jnp.float32) * 0.2
        w_pw = jax.random.normal(k_pw, (C_out, C_in, 1), dtype=jnp.float32) * 0.2

        out = child_sep_conv(x, w_dw, w_pw, K, max_rows_per_tile=max_rows)
        out = jax.block_until_ready(out)
        ref = _reference(x, w_dw, w_pw, K)
        np.testing.assert_allclose(np.asarray(out), np.asarray(ref),
                                   rtol=tol, atol=tol)

    print("KERNEL_OK")
</pallas_src>

<mosaic_0001>
module attributes {stable_mosaic.version = 11 : i64} {
  func.func @_sepconv_kernel(%arg0: i32, %arg1: i32, %arg2: memref<1x8x4xf32, #tpu.memory_space<vmem>>, %arg3: memref<1x1x1x4xf32, #tpu.memory_space<vmem>>, %arg4: memref<1x1x1x4xf32, #tpu.memory_space<vmem>>, %arg5: memref<3x4xf32, #tpu.memory_space<vmem>>, %arg6: memref<4x128xf32, #tpu.memory_space<vmem>>, %arg7: memref<1x8x128xf32, #tpu.memory_space<vmem>>) attributes {dimension_semantics = [#tpu.dimension_semantics<parallel>, #tpu.dimension_semantics<parallel>], iteration_bounds = array<i64: 2, 1>, scalar_prefetch = 0 : i64, scratch_operands = 0 : i64, tpu.core_type = #tpu.core_type<tc>, window_params = [{transform_indices = @transform_0, window_bounds = array<i64: 1, 8, 4>}, {transform_indices = @transform_1, window_bounds = array<i64: 1, 1, 1, 4>}, {transform_indices = @transform_2, window_bounds = array<i64: 1, 1, 1, 4>}, {pipeline_mode = #tpu.pipeline_mode<synchronous>, transform_indices = @transform_3, window_bounds = array<i64: 3, 4>}, {pipeline_mode = #tpu.pipeline_mode<synchronous>, transform_indices = @transform_4, window_bounds = array<i64: 4, 128>}, {transform_indices = @transform_5, window_bounds = array<i64: 1, 8, 128>}]} {
    %c0 = arith.constant 0 : index
    %c0_0 = arith.constant 0 : index
    %0 = vector.load %arg5[%c0, %c0_0] : memref<3x4xf32, #tpu.memory_space<vmem>>, vector<1x4xf32>
    %c1 = arith.constant 1 : index
    %c0_1 = arith.constant 0 : index
    %1 = vector.load %arg5[%c1, %c0_1] : memref<3x4xf32, #tpu.memory_space<vmem>>, vector<1x4xf32>
    %c2 = arith.constant 2 : index
    %c0_2 = arith.constant 0 : index
    %2 = vector.load %arg5[%c2, %c0_2] : memref<3x4xf32, #tpu.memory_space<vmem>>, vector<1x4xf32>
    %c0_3 = arith.constant 0 : index
    %c0_4 = arith.constant 0 : index
    %3 = vector.load %arg6[%c0_3, %c0_4] : memref<4x128xf32, #tpu.memory_space<vmem>>, vector<4x128xf32>
    %cst = arith.constant 0.000000e+00 : f32
    %4 = vector.broadcast %cst : f32 to vector<8x4xf32>
    %c0_5 = arith.constant 0 : index
    %c0_6 = arith.constant 0 : index
    %c0_7 = arith.constant 0 : index
    %c0_8 = arith.constant 0 : index
    %5 = vector.load %arg3[%c0_5, %c0_6, %c0_7, %c0_8] : memref<1x1x1x4xf32, #tpu.memory_space<vmem>>, vector<1x1x1x4xf32>
    %6 = vector.shape_cast %5 : vector<1x1x1x4xf32> to vector<1x4xf32>
    %c0_9 = arith.constant 0 : index
    %c0_10 = arith.constant 0 : index
    %c0_11 = arith.constant 0 : index
    %7 = vector.load %arg2[%c0_9, %c0_10, %c0_11] : memref<1x8x4xf32, #tpu.memory_space<vmem>>, vector<1x7x4xf32>
    %8 = vector.shape_cast %7 : vector<1x7x4xf32> to vector<7x4xf32>
    %9 = tpu.concatenate %6, %8 in 0 : vector<1x4xf32>, vector<7x4xf32> -> vector<8x4xf32>
    %10 = vector.broadcast %0 : vector<1x4xf32> to vector<8x4xf32>
    %11 = arith.mulf %9, %10 : vector<8x4xf32>
    %12 = arith.addf %4, %11 : vector<8x4xf32>
    %c0_12 = arith.constant 0 : index
    %c0_13 = arith.constant 0 : index
    %c0_14 = arith.constant 0 : index
    %13 = vector.load %arg2[%c0_12, %c0_13, %c0_14] : memref<1x8x4xf32, #tpu.memory_space<vmem>>, vector<1x8x4xf32>
    %14 = vector.shape_cast %13 : vector<1x8x4xf32> to vector<8x4xf32>
    %15 = vector.broadcast %1 : vector<1x4xf32> to vector<8x4xf32>
    %16 = arith.mulf %14, %15 : vector<8x4xf32>
    %17 = arith.addf %12, %16 : vector<8x4xf32>
    %c0_15 = arith.constant 0 : index
    %c1_16 = arith.constant 1 : index
    %c0_17 = arith.constant 0 : index
    %18 = vector.load %arg2[%c0_15, %c1_16, %c0_17] : memref<1x8x4xf32, #tpu.memory_space<vmem>>, vector<1x7x4xf32>
    %19 = vector.shape_cast %18 : vector<1x7x4xf32> to vector<7x4xf32>
    %c0_18 = arith.constant 0 : index
    %c0_19 = arith.constant 0 : index
    %c0_20 = arith.constant 0 : index
    %c0_21 = arith.constant 0 : index
    %20 = vector.load %arg4[%c0_18, %c0_19, %c0_20, %c0_21] : memref<1x1x1x4xf32, #tpu.memory_space<vmem>>, vector<1x1x1x4xf32>
    %21 = vector.shape_cast %20 : vector<1x1x1x4xf32> to vector<1x4xf32>
    %22 = tpu.concatenate %19, %21 in 0 : vector<7x4xf32>, vector<1x4xf32> -> vector<8x4xf32>
    %23 = vector.broadcast %2 : vector<1x4xf32> to vector<8x4xf32>
    %24 = arith.mulf %22, %23 : vector<8x4xf32>
    %25 = arith.addf %17, %24 : vector<8x4xf32>
    %cst_22 = arith.constant 0.000000e+00 : f32
    %26 = vector.broadcast %cst_22 : f32 to vector<8x4xf32>
    %27 = arith.maximumf %25, %26 : vector<8x4xf32>
    %28 = vector.extract_strided_slice %27 {offsets = [0, 0], sizes = [8, 1], strides = [1, 1]} : vector<8x4xf32> to vector<8x1xf32>
    %29 = vector.extract_strided_slice %3 {offsets = [0, 0], sizes = [1, 128], strides = [1, 1]} : vector<4x128xf32> to vector<1x128xf32>
    %30 = vector.broadcast %28 : vector<8x1xf32> to vector<8x128xf32>
    %31 = vector.broadcast %29 : vector<1x128xf32> to vector<8x128xf32>
    %32 = arith.mulf %30, %31 : vector<8x128xf32>
    %33 = vector.extract_strided_slice %27 {offsets = [0, 1], sizes = [8, 1], strides = [1, 1]} : vector<8x4xf32> to vector<8x1xf32>
    %34 = vector.extract_strided_slice %3 {offsets = [1, 0], sizes = [1, 128], strides = [1, 1]} : vector<4x128xf32> to vector<1x128xf32>
    %35 = vector.broadcast %33 : vector<8x1xf32> to vector<8x128xf32>
    %36 = vector.broadcast %34 : vector<1x128xf32> to vector<8x128xf32>
    %37 = arith.mulf %35, %36 : vector<8x128xf32>
    %38 = arith.addf %32, %37 : vector<8x128xf32>
    %39 = vector.extract_strided_slice %27 {offsets = [0, 2], sizes = [8, 1], strides = [1, 1]} : vector<8x4xf32> to vector<8x1xf32>
    %40 = vector.extract_strided_slice %3 {offsets = [2, 0], sizes = [1, 128], strides = [1, 1]} : vector<4x128xf32> to vector<1x128xf32>
    %41 = vector.broadcast %39 : vector<8x1xf32> to vector<8x128xf32>
    %42 = vector.broadcast %40 : vector<1x128xf32> to vector<8x128xf32>
    %43 = arith.mulf %41, %42 : vector<8x128xf32>
    %44 = arith.addf %38, %43 : vector<8x128xf32>
    %45 = vector.extract_strided_slice %27 {offsets = [0, 3], sizes = [8, 1], strides = [1, 1]} : vector<8x4xf32> to vector<8x1xf32>
    %46 = vector.extract_strided_slice %3 {offsets = [3, 0], sizes = [1, 128], strides = [1, 1]} : vector<4x128xf32> to vector<1x128xf32>
    %47 = vector.broadcast %45 : vector<8x1xf32> to vector<8x128xf32>
    %48 = vector.broadcast %46 : vector<1x128xf32> to vector<8x128xf32>
    %49 = arith.mulf %47, %48 : vector<8x128xf32>
    %50 = arith.addf %44, %49 : vector<8x128xf32>
    %c0_23 = arith.constant 0 : index
    %c0_24 = arith.constant 0 : index
    %c0_25 = arith.constant 0 : index
    %51 = vector.load %arg7[%c0_23, %c0_24, %c0_25] : memref<1x8x128xf32, #tpu.memory_space<vmem>>, vector<1x8x128xf32>
    %52 = vector.shape_cast %51 : vector<1x8x128xf32> to vector<8x128xf32>
    %53 = vector.shape_cast %50 : vector<8x128xf32> to vector<1x8x128xf32>
    tpu.vector_store %arg7[%c0_23, %c0_24, %c0_25], %53 {strides = array<i32>} : memref<1x8x128xf32, #tpu.memory_space<vmem>>, vector<1x8x128xf32>,
    return
  }
  func.func @transform_0(%arg0: i32, %arg1: i32) -> (i32, i32, i32) {
    %c0_i32 = arith.constant 0 : i32
    %c0_i32_0 = arith.constant 0 : i32
    return %arg0, %arg1, %c0_i32 : i32, i32, i32
  }
  func.func @transform_1(%arg0: i32, %arg1: i32) -> (i32, i32, i32, i32) {
    %c0_i32 = arith.constant 0 : i32
    %c0_i32_0 = arith.constant 0 : i32
    %c0_i32_1 = arith.constant 0 : i32
    return %arg0, %arg1, %c0_i32, %c0_i32_0 : i32, i32, i32, i32
  }
  func.func @transform_2(%arg0: i32, %arg1: i32) -> (i32, i32, i32, i32) {
    %c0_i32 = arith.constant 0 : i32
    %c0_i32_0 = arith.constant 0 : i32
    %c0_i32_1 = arith.constant 0 : i32
    return %arg0, %arg1, %c0_i32, %c0_i32_0 : i32, i32, i32, i32
  }
  func.func @transform_3(%arg0: i32, %arg1: i32) -> (i32, i32) {
    %c0_i32 = arith.constant 0 : i32
    %c0_i32_0 = arith.constant 0 : i32
    %c0_i32_1 = arith.constant 0 : i32
    return %c0_i32, %c0_i32_0 : i32, i32
  }
  func.func @transform_4(%arg0: i32, %arg1: i32) -> (i32, i32) {
    %c0_i32 = arith.constant 0 : i32
    %c0_i32_0 = arith.constant 0 : i32
    %c0_i32_1 = arith.constant 0 : i32
    return %c0_i32, %c0_i32_0 : i32, i32
  }
  func.func @transform_5(%arg0: i32, %arg1: i32) -> (i32, i32, i32) {
    %c0_i32 = arith.constant 0 : i32
    %c0_i32_0 = arith.constant 0 : i32
    return %arg0, %arg1, %c0_i32 : i32, i32, i32
  }
}

</mosaic_0001>

<llo_original>
// kernel: tpu_custom_call.1
$region0: #{tpu_custom_call.1}
  #allocation0 [shape = 'u32[]', space=smem, size = 0x4, offset = 0x4, fixed_abs, tag = 'smem constant byte address 0x4 - core index']
  #allocation1 [shape = 'u32[144,128]{1,0:T(1,128)}', space=vmem, size = 0x12000, scoped, tag = 'internal scratch']
  %s0 = inlined_call_operand.vmem [shape: f32[2,8,4], index: 0, kind: input, shape index: {}]
  %s1 = inlined_call_operand.vmem [shape: f32[2,1,1,4], index: 1, kind: input, shape index: {}]
  %s2 = inlined_call_operand.vmem [shape: f32[2,1,1,4], index: 2, kind: input, shape index: {}]
  %s3 = inlined_call_operand.vmem [shape: f32[3,4], index: 3, kind: input, shape index: {}]
  %s4 = inlined_call_operand.vmem [shape: f32[4,128], index: 4, kind: input, shape index: {}]
  %s5 = inlined_call_operand.hbm [shape: f32[2,8,128], index: 5, kind: output, shape index: {}]
  %s6 = sld [smem:[#allocation0]]
  $region53: #{tpu_custom_call.1} parent=0
    _
  %s8 = ssub.s32 1, %s6
  %s9 = scalar_select 0, %s8, %s6
  $region1: #{tpu_custom_call.1} parent=0
    #allocation2 [shape = 'u8[8192]{0}', space=vmem, size = 0x2000, scoped, tag = 'output window, operand 0']
    #allocation3 [shape = 's32[2]{0}', space=sflag, size = 0x8, scoped, tag = 'scoped memory for tpu_custom_call.1']
    %10 = vsyncpa [#allocation3], 0
    %s11 = scalar_lea.sflag [#allocation3], 1
    %12 = vsyncpa %s11, 0
    loop: start=0, step=1, limit=4
    $region2: #{tpu_custom_call.1} parent=1 // loop_pre_header
      _
    $region3: #{tpu_custom_call.1} parent=1 // loop_header
      %s14 = sphi 0, %s18
      %p15 = scmp.ge.s32.totalorder %s14, 4
      %s21 = sphi 0, %s33
      %s22 = sphi 0, %s29
      %s23 = sphi 0, %s21
      %s24 = sphi 0, %s22
      %s25 = sphi 0, %s23
      %s26 = sphi 0, %s24
      %s38 = sphi 0, %s40
      %s41 = sphi 0, %s38
      %s42 = sphi 0, %s41
      %s58 = sphi 0, %s42
      %s66 = sphi 0, %s68
      %s69 = sphi 0, %s66
      %s70 = sphi 0, %s69
      %s86 = sphi 0, %s70
      %s94 = sphi 0, %s96
      %s97 = sphi 0, %s94
      %s98 = sphi 0, %s97
      %s114 = sphi 0, %s98
      %s118 = sphi 0, %s118
      %s120 = sphi 0, %s118
      %s121 = sphi 0, %s120
      %s135 = sphi 0, %s121
      %s139 = sphi 0, %s139
      %s141 = sphi 0, %s139
      %s142 = sphi 0, %s141
      %s156 = sphi 0, %s142
      %s164 = sphi 0, %s166
      %s167 = sphi 0, %s164
      %s168 = sphi 0, %s167
      %s184 = sphi 0, %s168
    $region4: #{tpu_custom_call.1} parent=1 // loop_header_branch
      %17 = sbr.rel (%p15) target = $region8
    $region5: #{tpu_custom_call.1} parent=1 // loop_body
      %s19 = ssub.s32 %s14, 1
      %s20 = ssub.s32 %s14, 2
      %s27 = sadd.s32 1, %s22
      %p28 = scmp.ge.s32.totalorder %s27, 1
      %s29 = scalar_select %p28, 0, %s27
      %s30 = sadd.s32 1, %s21
      %s31 = scalar_select %p28, %s30, %s21
      %p32 = scmp.ge.s32.totalorder %s31, 2
      %s33 = scalar_select %p32, 0, %s31
      %s34 = ssub.s32 %s21, %s33
      %s35 = ssub.s32 %s22, %s29
      %s36 = sor.u32 %s34, %s35
      %p37 = scmp.eq.s32.totalorder %s36, 0
      %s39 = sadd.s32 %s38, 1
      %s40 = scalar_select %p37, %s38, %s39
      %p43 = pneg %p37
      %p44 = scmp.eq.s32.totalorder %s14, 1
      %p45 = por %p43, %p44
      %p46 = scmp.ne.s32.totalorder %s38, %s41
      %p47 = scmp.eq.s32.totalorder %s14, 0
      %p48 = por %p46, %p47
      %p49 = scmp.ne.s32.totalorder %s38, %s41
      %p50 = scmp.eq.s32.totalorder %s19, 1
      %p51 = por %p49, %p50
      %p52 = scmp.ne.s32.totalorder %s41, %s42
      %p53 = scmp.eq.s32.totalorder %s19, 0
      %p54 = por %p52, %p53
      %p55 = scmp.ne.s32.totalorder %s41, %s42
      %p56 = scmp.eq.s32.totalorder %s20, 1
      %p57 = por %p55, %p56
      %p59 = scmp.ne.s32.totalorder %s42, %s58
      %p60 = scmp.eq.s32.totalorder %s20, 0
      %p61 = por %p59, %p60
      %s62 = ssub.s32 %s21, %s33
      %s63 = ssub.s32 %s22, %s29
      %s64 = sor.u32 %s62, %s63
      %p65 = scmp.eq.s32.totalorder %s64, 0
      %s67 = sadd.s32 %s66, 1
      %s68 = scalar_select %p65, %s66, %s67
      %p71 = pneg %p65
      %p72 = scmp.eq.s32.totalorder %s14, 1
      %p73 = por %p71, %p72
      %p74 = scmp.ne.s32.totalorder %s66, %s69
      %p75 = scmp.eq.s32.totalorder %s14, 0
      %p76 = por %p74, %p75
      %p77 = scmp.ne.s32.totalorder %s66, %s69
      %p78 = scmp.eq.s32.totalorder %s19, 1
      %p79 = por %p77, %p78
      %p80 = scmp.ne.s32.totalorder %s69, %s70
      %p81 = scmp.eq.s32.totalorder %s19, 0
      %p82 = por %p80, %p81
      %p83 = scmp.ne.s32.totalorder %s69, %s70
      %p84 = scmp.eq.s32.totalorder %s20, 1
      %p85 = por %p83, %p84
      %p87 = scmp.ne.s32.totalorder %s70, %s86
      %p88 = scmp.eq.s32.totalorder %s20, 0
      %p89 = por %p87, %p88
      %s90 = ssub.s32 %s21, %s33
      %s91 = ssub.s32 %s22, %s29
      %s92 = sor.u32 %s90, %s91
      %p93 = scmp.eq.s32.totalorder %s92, 0
      %s95 = sadd.s32 %s94, 1
      %s96 = scalar_select %p93, %s94, %s95
      %p99 = pneg %p93
      %p100 = scmp.eq.s32.totalorder %s14, 1
      %p101 = por %p99, %p100
      %p102 = scmp.ne.s32.totalorder %s94, %s97
      %p103 = scmp.eq.s32.totalorder %s14, 0
      %p104 = por %p102, %p103
      %p105 = scmp.ne.s32.totalorder %s94, %s97
      %p106 = scmp.eq.s32.totalorder %s19, 1
      %p107 = por %p105, %p106
      %p108 = scmp.ne.s32.totalorder %s97, %s98
      %p109 = scmp.eq.s32.totalorder %s19, 0
      %p110 = por %p108, %p109
      %p111 = scmp.ne.s32.totalorder %s97, %s98
      %p112 = scmp.eq.s32.totalorder %s20, 1
      %p113 = por %p111, %p112
      %p115 = scmp.ne.s32.totalorder %s98, %s114
      %p116 = scmp.eq.s32.totalorder %s20, 0
      %p117 = por %p115, %p116
      %s119 = sadd.s32 %s118, 1
      %p122 = scmp.eq.s32.totalorder %s14, 1
      %p123 = scmp.ne.s32.totalorder %s118, %s120
      %p124 = scmp.eq.s32.totalorder %s14, 0
      %p125 = por %p123, %p124
      %p126 = scmp.ne.s32.totalorder %s118, %s120
      %p127 = scmp.eq.s32.totalorder %s19, 1
      %p128 = por %p126, %p127
      %p129 = scmp.ne.s32.totalorder %s120, %s121
      %p130 = scmp.eq.s32.totalorder %s19, 0
      %p131 = por %p129, %p130
      %p132 = scmp.ne.s32.totalorder %s120, %s121
      %p133 = scmp.eq.s32.totalorder %s20, 1
      %p134 = por %p132, %p133
      %p136 = scmp.ne.s32.totalorder %s121, %s135
      %p137 = scmp.eq.s32.totalorder %s20, 0
      %p138 = por %p136, %p137
      %s140 = sadd.s32 %s139, 1
      %p143 = scmp.eq.s32.totalorder %s14, 1
      %p144 = scmp.ne.s32.totalorder %s139, %s141
      %p145 = scmp.eq.s32.totalorder %s14, 0
      %p146 = por %p144, %p145
      %p147 = scmp.ne.s32.totalorder %s139, %s141
      %p148 = scmp.eq.s32.totalorder %s19, 1
      %p149 = por %p147, %p148
      %p150 = scmp.ne.s32.totalorder %s141, %s142
      %p151 = scmp.eq.s32.totalorder %s19, 0
      %p152 = por %p150, %p151
      %p153 = scmp.ne.s32.totalorder %s141, %s142
      %p154 = scmp.eq.s32.totalorder %s20, 1
      %p155 = por %p153, %p154
      %p157 = scmp.ne.s32.totalorder %s142, %s156
      %p158 = scmp.eq.s32.totalorder %s20, 0
      %p159 = por %p157, %p158
      %s160 = ssub.s32 %s21, %s33
      %s161 = ssub.s32 %s22, %s29
      %s162 = sor.u32 %s160, %s161
      %p163 = scmp.eq.s32.totalorder %s162, 0
      %s165 = sadd.s32 %s164, 1
      %s166 = scalar_select %p163, %s164, %s165
      %p169 = pneg %p163
      %p170 = scmp.eq.s32.totalorder %s14, 1
      %p171 = por %p169, %p170
      %p172 = scmp.ne.s32.totalorder %s164, %s167
      %p173 = scmp.eq.s32.totalorder %s14, 0
      %p174 = por %p172, %p173
      %p175 = scmp.ne.s32.totalorder %s164, %s167
      %p176 = scmp.eq.s32.totalorder %s19, 1
      %p177 = por %p175, %p176
      %p178 = scmp.ne.s32.totalorder %s167, %s168
      %p179 = scmp.eq.s32.totalorder %s19, 0
      %p180 = por %p178, %p179
      %p181 = scmp.ne.s32.totalorder %s167, %s168
      %p182 = scmp.eq.s32.totalorder %s20, 1
      %p183 = por %p181, %p182
      %p185 = scmp.ne.s32.totalorder %s168, %s184
      %p186 = scmp.eq.s32.totalorder %s20, 0
      %p187 = por %p185, %p186
      %p188 = scmp.le.s32.totalorder 1, %s14
      %p189 = scmp.lt.s32.totalorder %s14, 3
      %p190 = pnand %p188, %p189
      %p191 = pneg %p190
      // Predicated region
      $region9: #{tpu_custom_call.1} parent=5 // pred_check
        _
      $region10: #{tpu_custom_call.1} parent=5 // pred_check_branch
        %193 = sbr.rel (%p190) target = $region12
      $region11: #{tpu_custom_call.1} parent=5 // pred_region
        %s194 = ssub.s32 %s14, 1
        // Predicated region
        $region13: #{tpu_custom_call.1} parent=11 // pred_check
          %p195 = pneg %p131
        $region14: #{tpu_custom_call.1} parent=11 // pred_check_branch
          %197 = sbr.rel (%p195) target = $region16
        $region15: #{tpu_custom_call.1} parent=11 // pred_region
          _
        $region16: #{tpu_custom_call.1} parent=11 // pred_fallthru
          _
        // Predicated region
        $region17: #{tpu_custom_call.1} parent=11 // pred_check
          %p198 = pneg %p152
        $region18: #{tpu_custom_call.1} parent=11 // pred_check_branch
          %200 = sbr.rel (%p198) target = $region20
        $region19: #{tpu_custom_call.1} parent=11 // pred_region
          _
        $region20: #{tpu_custom_call.1} parent=11 // pred_fallthru
          _
      $region12: #{tpu_custom_call.1} parent=5 // pred_fallthru
        _
      %p201 = scmp.lt.s32.totalorder %s14, 2
      // Predicated region
      $region21: #{tpu_custom_call.1} parent=5 // pred_check
        %p202 = pneg %p201
      $region22: #{tpu_custom_call.1} parent=5 // pred_check_branch
        %204 = sbr.rel (%p202) target = $region24
      $region23: #{tpu_custom_call.1} parent=5 // pred_region
        // Predicated region
        $region25: #{tpu_custom_call.1} parent=23 // pred_check
          %p205 = pneg %p48
        $region26: #{tpu_custom_call.1} parent=23 // pred_check_branch
          %207 = sbr.rel (%p205) target = $region28
        $region27: #{tpu_custom_call.1} parent=23 // pred_region
          %p208 = scmp.lt.s32.totalorder %s21, 1
          %s209 = scalar_select %p208, %s21, 1
          %p210 = scmp.lt.s32.totalorder %s22, 0
          %s211 = scalar_select %p210, %s22, 0
          %s212 = sadd.s32 %s211, %s209
          %s213 = smul.addr %s212, 8
          %s214 = scalar_lea.vmem %s0, %s213
        $region28: #{tpu_custom_call.1} parent=23 // pred_fallthru
          _
        // Predicated region
        $region29: #{tpu_custom_call.1} parent=23 // pred_check
          %p215 = pneg %p76
        $region30: #{tpu_custom_call.1} parent=23 // pred_check_branch
          %217 = sbr.rel (%p215) target = $region32
        $region31: #{tpu_custom_call.1} parent=23 // pred_region
          %p218 = scmp.lt.s32.totalorder %s21, 1
          %s219 = scalar_select %p218, %s21, 1
          %p220 = scmp.lt.s32.totalorder %s22, 0
          %s221 = scalar_select %p220, %s22, 0
          %s222 = sadd.s32 %s221, %s219
          %s223 = scalar_lea.vmem %s1, %s222
        $region32: #{tpu_custom_call.1} parent=23 // pred_fallthru
          _
        // Predicated region
        $region33: #{tpu_custom_call.1} parent=23 // pred_check
          %p224 = pneg %p104
        $region34: #{tpu_custom_call.1} parent=23 // pred_check_branch
          %226 = sbr.rel (%p224) target = $region36
        $region35: #{tpu_custom_call.1} parent=23 // pred_region
          %p227 = scmp.lt.s32.totalorder %s21, 1
          %s228 = scalar_select %p227, %s21, 1
          %p229 = scmp.lt.s32.totalorder %s22, 0
          %s230 = scalar_select %p229, %s22, 0
          %s231 = sadd.s32 %s230, %s228
          %s232 = scalar_lea.vmem %s2, %s231
        $region36: #{tpu_custom_call.1} parent=23 // pred_fallthru
          _
      $region24: #{tpu_custom_call.1} parent=5 // pred_fallthru
        _
      %p233 = scmp.le.s32.totalorder 1, %s14
      %p234 = scmp.lt.s32.totalorder %s14, 3
      %p235 = pnand %p233, %p234
      %p236 = pneg %p235
      // Predicated region
      $region37: #{tpu_custom_call.1} parent=5 // pred_check
        _
      $region38: #{tpu_custom_call.1} parent=5 // pred_check_branch
        %238 = sbr.rel (%p235) target = $region40
      $region39: #{tpu_custom_call.1} parent=5 // pred_region
        %s239 = ssub.s32 %s14, 1
        %p240 = scmp.lt.s32.totalorder %s23, 1
        %s241 = scalar_select %p240, %s23, 1
        %p242 = scmp.lt.s32.totalorder %s24, 0
        %s243 = scalar_select %p242, %s24, 0
        %s244 = sadd.s32 %s243, %s241
        %s245 = smul.addr %s244, 8
        %s246 = scalar_lea.vmem %s0, %s245
        %p247 = pneg %p54
        %p248 = pneg %p51
        %p249 = scmp.lt.s32.totalorder %s23, 1
        %s250 = scalar_select %p249, %s23, 1
        %p251 = scmp.lt.s32.totalorder %s24, 0
        %s252 = scalar_select %p251, %s24, 0
        %s253 = sadd.s32 %s252, %s250
        %s254 = scalar_lea.vmem %s1, %s253
        %p255 = pneg %p82
        %p256 = pneg %p79
        %p257 = scmp.lt.s32.totalorder %s23, 1
        %s258 = scalar_select %p257, %s23, 1
        %p259 = scmp.lt.s32.totalorder %s24, 0
        %s260 = scalar_select %p259, %s24, 0
        %s261 = sadd.s32 %s260, %s258
        %s262 = scalar_lea.vmem %s2, %s261
        %p263 = pneg %p110
        %p264 = pneg %p107
        %p265 = pneg %p131
        %p266 = pneg %p128
        %p267 = pneg %p152
        %p268 = pneg %p149
        %p269 = pneg %p180
        %p270 = pneg %p177
        %s271 = sand.u32 %s167, 1
        %s272 = scalar_lea.sflag [#allocation3], %s271
        %s273 = sand.u32 %s167, 1
        %s274 = smul.addr %s273, 8
        %s275 = scalar_lea.vmem [#allocation2], %s274
        %p276 = scmp.lt.s32.totalorder %s23, 1
        %s277 = scalar_select %p276, %s23, 1
        %p278 = scmp.lt.s32.totalorder %s24, 0
        %s279 = scalar_select %p278, %s24, 0
        %s280 = sadd.s32 %s279, %s277
        %s281 = smul.addr %s280, 8
        %s282 = scalar_lea.vmem %s0, %s281
        %p283 = scmp.lt.s32.totalorder %s23, 1
        %s284 = scalar_select %p283, %s23, 1
        %p285 = scmp.lt.s32.totalorder %s24, 0
        %s286 = scalar_select %p285, %s24, 0
        %s287 = sadd.s32 %s286, %s284
        %s288 = scalar_lea.vmem %s1, %s287
        %p289 = scmp.lt.s32.totalorder %s23, 1
        %s290 = scalar_select %p289, %s23, 1
        %p291 = scmp.lt.s32.totalorder %s24, 0
        %s292 = scalar_select %p291, %s24, 0
        %s293 = sadd.s32 %s292, %s290
        %s294 = scalar_lea.vmem %s2, %s293
        %v295 = vld [vmem:[%s3] sm:$0x1]
        %v296 = vld [vmem:[%s3 + $0x1] sm:$0x1]
        %v297 = vld [vmem:[%s3 + $0x2] sm:$0x1]
        %v298 = vld [vmem:[%s4] sm:$0xf]
        %v299 = vld [vmem:[%s288] sm:$0x1]
        %v300 = vld [vmem:[%s282] sm:$0x7f]
        %v302 = vrot.slane %v300, 7
        %vm304 = vcmask 1040384
        %v305 = vsel %vm304, %v299, %v302
        %v306 = vlaneseq
        %v307 = vshrl.u32 %v306, 7
        %v308 = vsub.s32 0, %v307
        %v309 = vrot.slane %v295, %v308
        %v310 = vmul.f32 %v305, %v309
        %v311 = vadd.f32 %v310, 0.0
        %v312 = vld [vmem:[%s282] sm:$0xff]
        %v313 = vlaneseq
        %v314 = vshrl.u32 %v313, 7
        %v315 = vsub.s32 0, %v314
        %v316 = vrot.slane %v296, %v315
        %v317 = vmul.f32 %v312, %v316
        %v318 = vadd.f32 %v311, %v317
        %v319 = vld [vmem:[%s282 + $0x1] sm:$0x7f]
        %v320 = vld [vmem:[%s294] sm:$0x1]
        %v322 = vlaneseq
        %v323 = vshrl.u32 %v322, 7
        %v324 = vsub.s32 0, %v323
        %v325 = vrot.slane %v320, %v324
        %vm327 = vcmask 1046528
        %v328 = vsel %vm327, %v319, %v325
        %v329 = vlaneseq
        %v330 = vshrl.u32 %v329, 7
        %v331 = vsub.s32 0, %v330
        %v332 = vrot.slane %v297, %v331
        %v333 = vmul.f32 %v328, %v332
        %v334 = vadd.f32 %v318, %v333
        %v335 = vmax.f32 %v334, 0.0
        %337 = vset.pattern.permute.xlu0 0
        %338 = vperm.xlu0 %337, %v335
        %v339 = vpop.permute.xlu0 %338
        %v341 = vlaneseq
        %v342 = vshrl.u32 %v341, 7
        %v343 = vsub.s32 0, %v342
        %v344 = vrot.slane %v298, %v343
        %v345 = vmul.f32 %v339, %v344
        %346 = vset.pattern.permute.xlu0 1
        %347 = vperm.xlu0 %346, %v335
        %v348 = vpop.permute.xlu0 %347
        %v350 = vlaneseq
        %v351 = vshrl.u32 %v350, 7
        %v352 = vsub.s32 1, %v351
        %v353 = vrot.slane %v298, %v352
        %v354 = vmul.f32 %v348, %v353
        %v355 = vadd.f32 %v345, %v354
        %356 = vset.pattern.permute.xlu0 2
        %357 = vperm.xlu0 %356, %v335
        %v358 = vpop.permute.xlu0 %357
        %v360 = vlaneseq
        %v361 = vshrl.u32 %v360, 7
        %v362 = vsub.s32 2, %v361
        %v363 = vrot.slane %v298, %v362
        %v364 = vmul.f32 %v358, %v363
        %v365 = vadd.f32 %v355, %v364
        %366 = vset.pattern.permute.xlu0 3
        %367 = vperm.xlu0 %366, %v335
        %v368 = vpop.permute.xlu0 %367
        %v370 = vlaneseq
        %v371 = vshrl.u32 %v370, 7
        %v372 = vsub.s32 3, %v371
        %v373 = vrot.slane %v298, %v372
        %v374 = vmul.f32 %v368, %v373
        %v375 = vadd.f32 %v365, %v374
        %376 = vst [vmem:[%s275] sm:$0xff] %v375
        %s377 = sand.u32 %s167, 1
        %s378 = scalar_lea.sflag [#allocation3], %s377
        %s379 = sand.u32 %s167, 1
        %s380 = smul.addr %s379, 8
        %s381 = scalar_lea.vmem [#allocation2], %s380
        // Predicated region
        $region41: #{tpu_custom_call.1} parent=39 // pred_check
          %p382 = pneg %p177
        $region42: #{tpu_custom_call.1} parent=39 // pred_check_branch
          %384 = sbr.rel (%p382) target = $region44
        $region43: #{tpu_custom_call.1} parent=39 // pred_region
          %s386 = ssub.s32 128, 128
          %387 = vsyncadd %s378, %s386
          %s388 = sadd.s32 %s24, %s23
          %s389 = smul.addr %s388, 128
          %s390 = scalar_lea.hbm %s5, %s389
          %s392 = sshll.u32 %s381, 4
          %s393 = int_to_ptr.vmem [resolvable:$true] %s392
          %395 = dma.vmem_to_hbm [thread:$0]  %s393, 128, %s390, %s378
        $region44: #{tpu_custom_call.1} parent=39 // pred_fallthru
          _
      $region40: #{tpu_custom_call.1} parent=5 // pred_fallthru
        _
      %p396 = scmp.le.s32.totalorder 2, %s14
      // Predicated region
      $region45: #{tpu_custom_call.1} parent=5 // pred_check
        %p397 = pneg %p396
      $region46: #{tpu_custom_call.1} parent=5 // pred_check_branch
        %399 = sbr.rel (%p397) target = $region48
      $region47: #{tpu_custom_call.1} parent=5 // pred_region
        %s400 = ssub.s32 %s14, 2
        // Predicated region
        $region49: #{tpu_custom_call.1} parent=47 // pred_check
          %p401 = pneg %p183
        $region50: #{tpu_custom_call.1} parent=47 // pred_check_branch
          %403 = sbr.rel (%p401) target = $region52
        $region51: #{tpu_custom_call.1} parent=47 // pred_region
          %s404 = sand.u32 %s168, 1
          %s405 = scalar_lea.sflag [#allocation3], %s404
          %s406 = sand.u32 %s168, 1
          %s407 = smul.addr %s406, 8
          %s408 = scalar_lea.vmem [#allocation2], %s407
          %409 = dma.done %s405, 128
        $region52: #{tpu_custom_call.1} parent=47 // pred_fallthru
          _
      $region48: #{tpu_custom_call.1} parent=5 // pred_fallthru
        _
    $region6: #{tpu_custom_call.1} parent=1 // loop_footer
      %s18 = sadd.s32 1, %s14
    $region7: #{tpu_custom_call.1} parent=1 // loop_footer_branch
      %13 = sbr.rel target = $region3
    $region8: #{tpu_custom_call.1} parent=1 // loop_exit
      _
    %410 = vsyncpa [#allocation3], 1
    %s411 = scalar_lea.sflag [#allocation3], 1
    %412 = vsyncpa %s411, 1

</llo_original>
